<compile_context>
chip_gen: v6e
topology: v6e:2x2x1
jax: 0.10.0
libtpu: 0.0.40
codegen_flags: <defaults>
</compile_context>

<pallas_src>
import math

import jax
import jax.numpy as jnp
import numpy as np
from jax.experimental import pallas as pl
from jax.experimental.pallas import tpu as pltpu

_INV_M = 1.0 / 11008.0                 # AlignMutualInfo: N / M
_LOG_INV_M = float(math.log(_INV_M))


# ----------------------------------------------------------------------------
# Fused Pallas kernel: edge_encoder + sent_encoder + AlignMutualInfo loss
# ----------------------------------------------------------------------------

def _grt_fused_kernel(edge_ref, lm_ref,
                      we_ref, be_ref, ws_ref, bs_ref,
                      wlm_ref, blm_ref, wg_ref, bg_ref,
                      o_ref):
    eps = jnp.float32(1e-12)
    inv_m = jnp.float32(_INV_M)
    log_inv_m = jnp.float32(_LOG_INV_M)

    # edge_encoder (MLP approximated by a single Linear) on the B selected
    # edge rows  ->  graph_tokens_in   (B, d_model)
    graph_tok = (jnp.dot(edge_ref[...], we_ref[...],
                         preferred_element_type=jnp.float32) + be_ref[...])

    # sent_encoder on the 2B gathered LM rows (pos rows first, then neg rows)
    lm_tok = (jnp.dot(lm_ref[...], ws_ref[...],
                      preferred_element_type=jnp.float32) + bs_ref[...])

    # AlignMutualInfo.lm_transform(graph_tokens_in) + L2 normalize
    lm = (jnp.dot(graph_tok, wlm_ref[...],
                  preferred_element_type=jnp.float32) + blm_ref[...])
    lm = lm * jax.lax.rsqrt(jnp.sum(lm * lm, axis=-1, keepdims=True) + eps)

    # AlignMutualInfo.gnn_transform on stacked [pos; neg] (single matmul) + L2 norm
    gn = (jnp.dot(lm_tok, wg_ref[...],
                  preferred_element_type=jnp.float32) + bg_ref[...])
    gn = gn * jax.lax.rsqrt(jnp.sum(gn * gn, axis=-1, keepdims=True) + eps)

    B = lm.shape[0]
    pos_gn = gn[:B]
    neg_gn = gn[B:]

    # diagonal(lm @ gn.T) == row-wise dot product
    dot_pos = jnp.sum(lm * pos_gn, axis=-1, keepdims=True)   # (B, 1)
    dot_neg = jnp.sum(lm * neg_gn, axis=-1, keepdims=True)   # (B, 1)

    # stable, mathematically-equivalent forms of
    #   log(logits / (logits + c))  and  log(1 - logits / (logits + c))
    pos_scores = dot_pos - jnp.log(jnp.exp(dot_pos) + inv_m)
    neg_scores = log_inv_m - jnp.log(jnp.exp(dot_neg) + inv_m)

    loss = -jnp.mean(pos_scores) - jnp.mean(neg_scores)
    o_ref[0, 0] = loss


def grt_fused_loss(edge_sel, lm_sel, params):
    """edge_sel: (B, edge_feat_dim), lm_sel: (2B, sent_dim) -> scalar loss."""
    B, EF = edge_sel.shape
    twoB, SD = lm_sel.shape
    we, be = params["edge_enc"]
    ws, bs = params["sent_enc"]
    wlm, blm = params["align_lm"]
    wg, bg = params["align_gnn"]
    D = we.shape[1]
    H = wlm.shape[1]

    out = pl.pallas_call(
        _grt_fused_kernel,
        out_shape=jax.ShapeDtypeStruct((1, 1), jnp.float32),
        grid=(1,),
        in_specs=[
            pl.BlockSpec((B, EF), lambda i: (0, 0)),
            pl.BlockSpec((twoB, SD), lambda i: (0, 0)),
            pl.BlockSpec((EF, D), lambda i: (0, 0)),
            pl.BlockSpec((1, D), lambda i: (0, 0)),
            pl.BlockSpec((SD, D), lambda i: (0, 0)),
            pl.BlockSpec((1, D), lambda i: (0, 0)),
            pl.BlockSpec((D, H), lambda i: (0, 0)),
            pl.BlockSpec((1, H), lambda i: (0, 0)),
            pl.BlockSpec((D, H), lambda i: (0, 0)),
            pl.BlockSpec((1, H), lambda i: (0, 0)),
        ],
        out_specs=pl.BlockSpec(memory_space=pltpu.MemorySpace.SMEM),
        compiler_params=pltpu.CompilerParams(
            dimension_semantics=("arbitrary",)),
    )(edge_sel, lm_sel, we, be, ws, bs, wlm, blm, wg, bg)
    return out[0, 0]


# ----------------------------------------------------------------------------
# GRT forward (jitted glue + fused Pallas kernel)
# ----------------------------------------------------------------------------

def init_linear(key, fan_in, fan_out):
    # matches FullTransformer._init_weights: normal(0, 0.02), zero bias
    w = 0.02 * jax.random.normal(key, (fan_in, fan_out), dtype=jnp.float32)
    b = jnp.zeros((1, fan_out), dtype=jnp.float32)
    return w, b


@jax.jit
def grt_forward(params, edge_feats, graph_starts, lm_all_states, matched_first):
    B, S, sent_dim = lm_all_states.shape

    # positive / negative LM-token index selection (vectorized; deterministic
    # stand-in for Matcher + random.randint — see TODO(synk) above).
    elems0 = matched_first[:, 0].astype(jnp.int32)
    elems1 = matched_first[:, 1].astype(jnp.int32)
    pos_idx = elems0                                  # reference: elems[random.randint(0,1)]
    neg_idx = elems0 + 5
    neg_idx = jnp.where((neg_idx == elems0) | (neg_idx == elems1),
                        neg_idx + 1, neg_idx)

    # Gather ONLY the rows consumed downstream.
    # construct_token + `graph_tokens[i][0]`: first edge token of each graph
    # == edge feature row at the graph's start offset.
    edge_sel = jnp.take(edge_feats, graph_starts, axis=0)          # (B, edge_feat_dim)

    lm_flat = lm_all_states.reshape(B * S, sent_dim)
    base = jnp.arange(B, dtype=jnp.int32) * S
    row_ids = jnp.concatenate([base + pos_idx, base + neg_idx])    # (2B,)
    lm_sel = jnp.take(lm_flat, row_ids, axis=0)                    # (2B, sent_dim)

    # fused Pallas kernel: edge_enc + sent_enc + AlignMutualInfo loss
    return grt_fused_loss(edge_sel, lm_sel, params)


# ----------------------------------------------------------------------------
# Main
# ----------------------------------------------------------------------------

if __name__ == "__main__":
    # small-shape config consistent with the module
    B = 2            # graphs / batch
    S = 8            # lm sequence length (max_seq_len)
    sent_dim = 32    # d_sentence
    d_model = 16     # args.transformer_dim
    align_hidden = 32
    n_ntype, n_etype = 3, 4
    edges_per_graph = 5
    E_total = B * edges_per_graph
    edge_feat_dim = n_etype + 2 * n_ntype      # one-hot edge + head/tail node types

    key = jax.random.PRNGKey(0)
    k_lm, k_edge, k_sent, k_alm, k_agnn, k_et, k_nt = jax.random.split(key, 7)

    # inputs
    lm_all_states = jax.random.normal(k_lm, (B, S, sent_dim), dtype=jnp.float32)

    edge_type = jax.random.randint(k_et, (E_total,), 0, n_etype)
    head_type = jax.random.randint(k_nt, (E_total,), 0, n_ntype)
    tail_type = (head_type + 1) % n_ntype
    edge_feats = jnp.concatenate(
        [jax.nn.one_hot(edge_type, n_etype, dtype=jnp.float32),
         jax.nn.one_hot(head_type, n_ntype, dtype=jnp.float32),
         jax.nn.one_hot(tail_type, n_ntype, dtype=jnp.float32)], axis=1)

    graph_starts = jnp.asarray([g * edges_per_graph for g in range(B)],
                               dtype=jnp.int32)

    # deterministic stand-in for Matcher output (head/tail matched LM indices)
    matched_first = jnp.asarray(np.array([[1, 2], [2, 3]], dtype=np.int32))

    # parameters (deterministic init, matching module __init__ shapes at small size)
    params = {
        "edge_enc": init_linear(k_edge, edge_feat_dim, d_model),
        "sent_enc": init_linear(k_sent, sent_dim, d_model),
        "align_lm": init_linear(k_alm, d_model, align_hidden),
        "align_gnn": init_linear(k_agnn, d_model, align_hidden),
    }

    loss = grt_forward(params, edge_feats, graph_starts, lm_all_states,
                       matched_first)
    loss = jax.block_until_ready(loss)
    assert jnp.isfinite(loss), "align loss is not finite"
    print("KERNEL_OK")
</pallas_src>

<mosaic_0001>
module attributes {stable_mosaic.version = 11 : i64} {
  func.func @_grt_fused_kernel(%arg0: i32, %arg1: memref<2x10xf32, #tpu.memory_space<vmem>>, %arg2: memref<4x32xf32, #tpu.memory_space<vmem>>, %arg3: memref<10x16xf32, #tpu.memory_space<vmem>>, %arg4: memref<1x16xf32, #tpu.memory_space<vmem>>, %arg5: memref<32x16xf32, #tpu.memory_space<vmem>>, %arg6: memref<1x16xf32, #tpu.memory_space<vmem>>, %arg7: memref<16x32xf32, #tpu.memory_space<vmem>>, %arg8: memref<1x32xf32, #tpu.memory_space<vmem>>, %arg9: memref<16x32xf32, #tpu.memory_space<vmem>>, %arg10: memref<1x32xf32, #tpu.memory_space<vmem>>, %arg11: memref<1x1xf32, #tpu.memory_space<smem>>) attributes {dimension_semantics = [#tpu.dimension_semantics<arbitrary>], iteration_bounds = array<i64: 1>, scalar_prefetch = 0 : i64, scratch_operands = 0 : i64, tpu.core_type = #tpu.core_type<tc>, window_params = [{pipeline_mode = #tpu.pipeline_mode<synchronous>, transform_indices = @transform_0, window_bounds = array<i64: 2, 10>}, {pipeline_mode = #tpu.pipeline_mode<synchronous>, transform_indices = @transform_1, window_bounds = array<i64: 4, 32>}, {pipeline_mode = #tpu.pipeline_mode<synchronous>, transform_indices = @transform_2, window_bounds = array<i64: 10, 16>}, {pipeline_mode = #tpu.pipeline_mode<synchronous>, transform_indices = @transform_3, window_bounds = array<i64: 1, 16>}, {pipeline_mode = #tpu.pipeline_mode<synchronous>, transform_indices = @transform_4, window_bounds = array<i64: 32, 16>}, {pipeline_mode = #tpu.pipeline_mode<synchronous>, transform_indices = @transform_5, window_bounds = array<i64: 1, 16>}, {pipeline_mode = #tpu.pipeline_mode<synchronous>, transform_indices = @transform_6, window_bounds = array<i64: 16, 32>}, {pipeline_mode = #tpu.pipeline_mode<synchronous>, transform_indices = @transform_7, window_bounds = array<i64: 1, 32>}, {pipeline_mode = #tpu.pipeline_mode<synchronous>, transform_indices = @transform_8, window_bounds = array<i64: 16, 32>}, {pipeline_mode = #tpu.pipeline_mode<synchronous>, transform_indices = @transform_9, window_bounds = array<i64: 1, 32>}, {transform_indices = @transform_10, window_bounds = array<i64: 1, 1>}]} {
    %c0 = arith.constant 0 : index
    %c0_0 = arith.constant 0 : index
    %0 = vector.load %arg1[%c0, %c0_0] : memref<2x10xf32, #tpu.memory_space<vmem>>, vector<2x10xf32>
    %c0_1 = arith.constant 0 : index
    %c0_2 = arith.constant 0 : index
    %1 = vector.load %arg3[%c0_1, %c0_2] : memref<10x16xf32, #tpu.memory_space<vmem>>, vector<10x16xf32>
    %cst = arith.constant dense<0.000000e+00> : vector<2x16xf32>
    %2 = tpu.matmul %0, %1, %cst {dimension_numbers = #tpu.dot_dimension_numbers<[1], [0], [0], [1], [0, 0, 1, 1], [], []>} : vector<2x10xf32>, vector<10x16xf32>, vector<2x16xf32> -> vector<2x16xf32>
    %c0_3 = arith.constant 0 : index
    %c0_4 = arith.constant 0 : index
    %3 = vector.load %arg4[%c0_3, %c0_4] : memref<1x16xf32, #tpu.memory_space<vmem>>, vector<1x16xf32>
    %4 = vector.broadcast %3 : vector<1x16xf32> to vector<2x16xf32>
    %5 = arith.addf %2, %4 : vector<2x16xf32>
    %c0_5 = arith.constant 0 : index
    %c0_6 = arith.constant 0 : index
    %6 = vector.load %arg2[%c0_5, %c0_6] : memref<4x32xf32, #tpu.memory_space<vmem>>, vector<4x32xf32>
    %c0_7 = arith.constant 0 : index
    %c0_8 = arith.constant 0 : index
    %7 = vector.load %arg5[%c0_7, %c0_8] : memref<32x16xf32, #tpu.memory_space<vmem>>, vector<32x16xf32>
    %cst_9 = arith.constant dense<0.000000e+00> : vector<4x16xf32>
    %8 = tpu.matmul %6, %7, %cst_9 {dimension_numbers = #tpu.dot_dimension_numbers<[1], [0], [0], [1], [0, 0, 1, 1], [], []>} : vector<4x32xf32>, vector<32x16xf32>, vector<4x16xf32> -> vector<4x16xf32>
    %c0_10 = arith.constant 0 : index
    %c0_11 = arith.constant 0 : index
    %9 = vector.load %arg6[%c0_10, %c0_11] : memref<1x16xf32, #tpu.memory_space<vmem>>, vector<1x16xf32>
    %10 = vector.broadcast %9 : vector<1x16xf32> to vector<4x16xf32>
    %11 = arith.addf %8, %10 : vector<4x16xf32>
    %c0_12 = arith.constant 0 : index
    %c0_13 = arith.constant 0 : index
    %12 = vector.load %arg7[%c0_12, %c0_13] : memref<16x32xf32, #tpu.memory_space<vmem>>, vector<16x32xf32>
    %cst_14 = arith.constant dense<0.000000e+00> : vector<2x32xf32>
    %13 = tpu.matmul %5, %12, %cst_14 {dimension_numbers = #tpu.dot_dimension_numbers<[1], [0], [0], [1], [0, 0, 1, 1], [], []>} : vector<2x16xf32>, vector<16x32xf32>, vector<2x32xf32> -> vector<2x32xf32>
    %c0_15 = arith.constant 0 : index
    %c0_16 = arith.constant 0 : index
    %14 = vector.load %arg8[%c0_15, %c0_16] : memref<1x32xf32, #tpu.memory_space<vmem>>, vector<1x32xf32>
    %15 = vector.broadcast %14 : vector<1x32xf32> to vector<2x32xf32>
    %16 = arith.addf %13, %15 : vector<2x32xf32>
    %17 = arith.mulf %16, %16 : vector<2x32xf32>
    %cst_17 = arith.constant dense<0.000000e+00> : vector<2xf32>
    %18 = vector.multi_reduction <add>, %17, %cst_17 [1] : vector<2x32xf32> to vector<2xf32>
    %19 = vector.shape_cast %18 : vector<2xf32> to vector<2x1xf32>
    %cst_18 = arith.constant 9.99999996E-13 : f32
    %20 = vector.broadcast %cst_18 : f32 to vector<2x1xf32>
    %21 = arith.addf %19, %20 : vector<2x1xf32>
    %22 = math.rsqrt %21 : vector<2x1xf32>
    %23 = vector.broadcast %22 : vector<2x1xf32> to vector<2x32xf32>
    %24 = arith.mulf %16, %23 : vector<2x32xf32>
    %c0_19 = arith.constant 0 : index
    %c0_20 = arith.constant 0 : index
    %25 = vector.load %arg9[%c0_19, %c0_20] : memref<16x32xf32, #tpu.memory_space<vmem>>, vector<16x32xf32>
    %cst_21 = arith.constant dense<0.000000e+00> : vector<4x32xf32>
    %26 = tpu.matmul %11, %25, %cst_21 {dimension_numbers = #tpu.dot_dimension_numbers<[1], [0], [0], [1], [0, 0, 1, 1], [], []>} : vector<4x16xf32>, vector<16x32xf32>, vector<4x32xf32> -> vector<4x32xf32>
    %c0_22 = arith.constant 0 : index
    %c0_23 = arith.constant 0 : index
    %27 = vector.load %arg10[%c0_22, %c0_23] : memref<1x32xf32, #tpu.memory_space<vmem>>, vector<1x32xf32>
    %28 = vector.broadcast %27 : vector<1x32xf32> to vector<4x32xf32>
    %29 = arith.addf %26, %28 : vector<4x32xf32>
    %30 = arith.mulf %29, %29 : vector<4x32xf32>
    %cst_24 = arith.constant dense<0.000000e+00> : vector<4xf32>
    %31 = vector.multi_reduction <add>, %30, %cst_24 [1] : vector<4x32xf32> to vector<4xf32>
    %32 = vector.shape_cast %31 : vector<4xf32> to vector<4x1xf32>
    %cst_25 = arith.constant 9.99999996E-13 : f32
    %33 = vector.broadcast %cst_25 : f32 to vector<4x1xf32>
    %34 = arith.addf %32, %33 : vector<4x1xf32>
    %35 = math.rsqrt %34 : vector<4x1xf32>
    %36 = vector.broadcast %35 : vector<4x1xf32> to vector<4x32xf32>
    %37 = arith.mulf %29, %36 : vector<4x32xf32>
    %38 = vector.extract_strided_slice %37 {offsets = [0, 0], sizes = [2, 32], strides = [1, 1]} : vector<4x32xf32> to vector<2x32xf32>
    %39 = vector.extract_strided_slice %37 {offsets = [2, 0], sizes = [2, 32], strides = [1, 1]} : vector<4x32xf32> to vector<2x32xf32>
    %40 = arith.mulf %24, %38 : vector<2x32xf32>
    %cst_26 = arith.constant dense<0.000000e+00> : vector<2xf32>
    %41 = vector.multi_reduction <add>, %40, %cst_26 [1] : vector<2x32xf32> to vector<2xf32>
    %42 = vector.shape_cast %41 : vector<2xf32> to vector<2x1xf32>
    %43 = arith.mulf %24, %39 : vector<2x32xf32>
    %cst_27 = arith.constant dense<0.000000e+00> : vector<2xf32>
    %44 = vector.multi_reduction <add>, %43, %cst_27 [1] : vector<2x32xf32> to vector<2xf32>
    %45 = vector.shape_cast %44 : vector<2xf32> to vector<2x1xf32>
    %46 = math.exp %42 : vector<2x1xf32>
    %cst_28 = arith.constant 9.08430229E-5 : f32
    %47 = vector.broadcast %cst_28 : f32 to vector<2x1xf32>
    %48 = arith.addf %46, %47 : vector<2x1xf32>
    %49 = math.log %48 : vector<2x1xf32>
    %50 = arith.subf %42, %49 : vector<2x1xf32>
    %51 = math.exp %45 : vector<2x1xf32>
    %cst_29 = arith.constant 9.08430229E-5 : f32
    %52 = vector.broadcast %cst_29 : f32 to vector<2x1xf32>
    %53 = arith.addf %51, %52 : vector<2x1xf32>
    %54 = math.log %53 : vector<2x1xf32>
    %cst_30 = arith.constant -9.30637741 : f32
    %55 = vector.broadcast %cst_30 : f32 to vector<2x1xf32>
    %56 = arith.subf %55, %54 : vector<2x1xf32>
    %57 = vector.shape_cast %50 : vector<2x1xf32> to vector<1x2x1xf32>
    %cst_31 = arith.constant dense<0.000000e+00> : vector<1xf32>
    %58 = vector.multi_reduction <add>, %57, %cst_31 [1, 2] : vector<1x2x1xf32> to vector<1xf32>
    %59 = vector.shape_cast %58 : vector<1xf32> to vector<1x1x1xf32>
    %60 = vector.extract %59[0, 0, 0] : f32 from vector<1x1x1xf32>
    %cst_32 = arith.constant 2.000000e+00 : f32
    %61 = arith.divf %60, %cst_32 : f32
    %cst_33 = arith.constant 0.000000e+00 : f32
    %62 = arith.subf %cst_33, %61 : f32
    %63 = vector.shape_cast %56 : vector<2x1xf32> to vector<1x2x1xf32>
    %cst_34 = arith.constant dense<0.000000e+00> : vector<1xf32>
    %64 = vector.multi_reduction <add>, %63, %cst_34 [1, 2] : vector<1x2x1xf32> to vector<1xf32>
    %65 = vector.shape_cast %64 : vector<1xf32> to vector<1x1x1xf32>
    %66 = vector.extract %65[0, 0, 0] : f32 from vector<1x1x1xf32>
    %cst_35 = arith.constant 2.000000e+00 : f32
    %67 = arith.divf %66, %cst_35 : f32
    %68 = arith.subf %62, %67 : f32
    %c0_36 = arith.constant 0 : index
    %c0_37 = arith.constant 0 : index
    %69 = memref.load %arg11[%c0_36, %c0_37] : memref<1x1xf32, #tpu.memory_space<smem>>
    memref.store %68, %arg11[%c0_36, %c0_37] : memref<1x1xf32, #tpu.memory_space<smem>>
    return
  }
  func.func @transform_0(%arg0: i32) -> (i32, i32) {
    %c0_i32 = arith.constant 0 : i32
    %c0_i32_0 = arith.constant 0 : i32
    %c0_i32_1 = arith.constant 0 : i32
    return %c0_i32, %c0_i32_0 : i32, i32
  }
  func.func @transform_1(%arg0: i32) -> (i32, i32) {
    %c0_i32 = arith.constant 0 : i32
    %c0_i32_0 = arith.constant 0 : i32
    %c0_i32_1 = arith.constant 0 : i32
    return %c0_i32, %c0_i32_0 : i32, i32
  }
  func.func @transform_2(%arg0: i32) -> (i32, i32) {
    %c0_i32 = arith.constant 0 : i32
    %c0_i32_0 = arith.constant 0 : i32
    %c0_i32_1 = arith.constant 0 : i32
    return %c0_i32, %c0_i32_0 : i32, i32
  }
  func.func @transform_3(%arg0: i32) -> (i32, i32) {
    %c0_i32 = arith.constant 0 : i32
    %c0_i32_0 = arith.constant 0 : i32
    %c0_i32_1 = arith.constant 0 : i32
    return %c0_i32, %c0_i32_0 : i32, i32
  }
  func.func @transform_4(%arg0: i32) -> (i32, i32) {
    %c0_i32 = arith.constant 0 : i32
    %c0_i32_0 = arith.constant 0 : i32
    %c0_i32_1 = arith.constant 0 : i32
    return %c0_i32, %c0_i32_0 : i32, i32
  }
  func.func @transform_5(%arg0: i32) -> (i32, i32) {
    %c0_i32 = arith.constant 0 : i32
    %c0_i32_0 = arith.constant 0 : i32
    %c0_i32_1 = arith.constant 0 : i32
    return %c0_i32, %c0_i32_0 : i32, i32
  }
  func.func @transform_6(%arg0: i32) -> (i32, i32) {
    %c0_i32 = arith.constant 0 : i32
    %c0_i32_0 = arith.constant 0 : i32
    %c0_i32_1 = arith.constant 0 : i32
    return %c0_i32, %c0_i32_0 : i32, i32
  }
  func.func @transform_7(%arg0: i32) -> (i32, i32) {
    %c0_i32 = arith.constant 0 : i32
    %c0_i32_0 = arith.constant 0 : i32
    %c0_i32_1 = arith.constant 0 : i32
    return %c0_i32, %c0_i32_0 : i32, i32
  }
  func.func @transform_8(%arg0: i32) -> (i32, i32) {
    %c0_i32 = arith.constant 0 : i32
    %c0_i32_0 = arith.constant 0 : i32
    %c0_i32_1 = arith.constant 0 : i32
    return %c0_i32, %c0_i32_0 : i32, i32
  }
  func.func @transform_9(%arg0: i32) -> (i32, i32) {
    %c0_i32 = arith.constant 0 : i32
    %c0_i32_0 = arith.constant 0 : i32
    %c0_i32_1 = arith.constant 0 : i32
    return %c0_i32, %c0_i32_0 : i32, i32
  }
  func.func @transform_10(%arg0: i32) -> (i32, i32) {
    %c0_i32 = arith.constant 0 : i32
    %c0_i32_0 = arith.constant 0 : i32
    %c0_i32_1 = arith.constant 0 : i32
    return %c0_i32, %c0_i32_0 : i32, i32
  }
}

</mosaic_0001>

<llo_original>
// kernel: grt_forward.1
$region0: #{grt_forward.1}
  #allocation0 [shape = 'u32[]', space=smem, size = 0x4, offset = 0x4, fixed_abs, tag = 'smem constant byte address 0x4 - core index']
  #allocation1 [shape = 'u32[144,128]{1,0:T(1,128)}', space=vmem, size = 0x12000, scoped, tag = 'internal scratch']
  %s0 = inlined_call_operand.vmem [shape: f32[2,10], index: 0, kind: input, shape index: {}]
  %s1 = inlined_call_operand.vmem [shape: f32[4,32], index: 1, kind: input, shape index: {}]
  %s2 = inlined_call_operand.vmem [shape: f32[10,16], index: 2, kind: input, shape index: {}]
  %s3 = inlined_call_operand.vmem [shape: f32[1,16], index: 3, kind: input, shape index: {}]
  %s4 = inlined_call_operand.vmem [shape: f32[32,16], index: 4, kind: input, shape index: {}]
  %s5 = inlined_call_operand.vmem [shape: f32[1,16], index: 5, kind: input, shape index: {}]
  %s6 = inlined_call_operand.vmem [shape: f32[16,32], index: 6, kind: input, shape index: {}]
  %s7 = inlined_call_operand.vmem [shape: f32[1,32], index: 7, kind: input, shape index: {}]
  %s8 = inlined_call_operand.vmem [shape: f32[16,32], index: 8, kind: input, shape index: {}]
  %s9 = inlined_call_operand.vmem [shape: f32[1,32], index: 9, kind: input, shape index: {}]
  %s10 = inlined_call_operand.hbm [shape: f32[1,1], index: 10, kind: output, shape index: {}]
  %s11 = sld [smem:[#allocation0]]
  $region50: #{grt_forward.1} parent=0
    _
  %s13 = ssub.s32 1, %s11
  %s14 = scalar_select 0, %s13, %s11
  $region1: #{grt_forward.1} parent=0
    #allocation2 [shape = 'u8[512]{0}', space=smem, size = 0x200, scoped, tag = 'output window, operand 0, single buffered']
    #allocation3 [shape = 's32[1]{0}', space=sflag, size = 0x4, scoped, tag = 'scoped memory for grt_forward.1']
    %15 = vsyncpa [#allocation3], 0
    // Predicated region
    $region2: #{grt_forward.1} parent=1 // pred_check
      _
    $region3: #{grt_forward.1} parent=1 // pred_check_branch
      %17 = sbr.rel (0) target = $region5
    $region4: #{grt_forward.1} parent=1 // pred_region
      _
    $region5: #{grt_forward.1} parent=1 // pred_fallthru
      _
    // Predicated region
    $region6: #{grt_forward.1} parent=1 // pred_check
      _
    $region7: #{grt_forward.1} parent=1 // pred_check_branch
      %19 = sbr.rel (0) target = $region9
    $region8: #{grt_forward.1} parent=1 // pred_region
      _
    $region9: #{grt_forward.1} parent=1 // pred_fallthru
      _
    // Predicated region
    $region10: #{grt_forward.1} parent=1 // pred_check
      _
    $region11: #{grt_forward.1} parent=1 // pred_check_branch
      %21 = sbr.rel (0) target = $region13
    $region12: #{grt_forward.1} parent=1 // pred_region
      _
    $region13: #{grt_forward.1} parent=1 // pred_fallthru
      _
    // Predicated region
    $region14: #{grt_forward.1} parent=1 // pred_check
      _
    $region15: #{grt_forward.1} parent=1 // pred_check_branch
      %23 = sbr.rel (0) target = $region17
    $region16: #{grt_forward.1} parent=1 // pred_region
      _
    $region17: #{grt_forward.1} parent=1 // pred_fallthru
      _
    // Predicated region
    $region18: #{grt_forward.1} parent=1 // pred_check
      _
    $region19: #{grt_forward.1} parent=1 // pred_check_branch
      %25 = sbr.rel (0) target = $region21
    $region20: #{grt_forward.1} parent=1 // pred_region
      _
    $region21: #{grt_forward.1} parent=1 // pred_fallthru
      _
    // Predicated region
    $region22: #{grt_forward.1} parent=1 // pred_check
      _
    $region23: #{grt_forward.1} parent=1 // pred_check_branch
      %27 = sbr.rel (0) target = $region25
    $region24: #{grt_forward.1} parent=1 // pred_region
      _
    $region25: #{grt_forward.1} parent=1 // pred_fallthru
      _
    // Predicated region
    $region26: #{grt_forward.1} parent=1 // pred_check
      _
    $region27: #{grt_forward.1} parent=1 // pred_check_branch
      %29 = sbr.rel (0) target = $region29
    $region28: #{grt_forward.1} parent=1 // pred_region
      _
    $region29: #{grt_forward.1} parent=1 // pred_fallthru
      _
    // Predicated region
    $region30: #{grt_forward.1} parent=1 // pred_check
      _
    $region31: #{grt_forward.1} parent=1 // pred_check_branch
      %31 = sbr.rel (0) target = $region33
    $region32: #{grt_forward.1} parent=1 // pred_region
      _
    $region33: #{grt_forward.1} parent=1 // pred_fallthru
      _
    // Predicated region
    $region34: #{grt_forward.1} parent=1 // pred_check
      _
    $region35: #{grt_forward.1} parent=1 // pred_check_branch
      %33 = sbr.rel (0) target = $region37
    $region36: #{grt_forward.1} parent=1 // pred_region
      _
    $region37: #{grt_forward.1} parent=1 // pred_fallthru
      _
    // Predicated region
    $region38: #{grt_forward.1} parent=1 // pred_check
      _
    $region39: #{grt_forward.1} parent=1 // pred_check_branch
      %35 = sbr.rel (0) target = $region41
    $region40: #{grt_forward.1} parent=1 // pred_region
      _
    $region41: #{grt_forward.1} parent=1 // pred_fallthru
      _
    %v36 = vld [vmem:[%s0] sm:$0x3]
    %v37 = vld [vmem:[%s2] sm:$0xff]
    %v38 = vld [vmem:[%s2 + $0x8] sm:$0x3]
    %v39 = vld [vmem:[%s3] sm:$0x1]
    %v41 = vlaneseq
    %v42 = vshrl.u32 %v41, 7
    %v43 = vsub.s32 0, %v42
    %v44 = vrot.slane %v39, %v43
    %vm46 = vcmask 80896
    %v48 = vsel %vm46, %v36, 0
    %vm50 = vcmask 1041408
    %v52 = vsel %vm50, %v38, 0
    %54 = vmatprep.subr.mxu0 0.0
    %55 = vmatpush1.msra.mxu0 0.0
    %56 = vmatprep.subr.mxu0 0.0
    %57 = vmatpush1.msra.mxu0 0.0
    %58 = vmatprep.subr.mxu0 0.0
    %59 = vmatpush1.msra.mxu0 0.0
    %60 = vmatprep.subr.mxu0 0.0
    %61 = vmatpush1.msra.mxu0 0.0
    %62 = vmatprep.subr.mxu0 0.0
    %63 = vmatpush1.msra.mxu0 0.0
    %64 = vmatprep.subr.mxu0 0.0
    %65 = vmatpush1.msra.mxu0 0.0
    %66 = vmatprep.subr.mxu0 0.0
    %67 = vmatpush1.msra.mxu0 0.0
    %68 = vmatprep.subr.mxu0 0.0
    %69 = vmatpush1.msra.mxu0 0.0
    %70 = vmatprep.subr.mxu0 0.0
    %71 = vmatpush1.msra.mxu0 0.0
    %72 = vmatprep.subr.mxu0 0.0
    %73 = vmatpush1.msra.mxu0 0.0
    %74 = vmatprep.subr.mxu0 0.0
    %75 = vmatpush1.msra.mxu0 0.0
    %76 = vmatprep.subr.mxu0 0.0
    %77 = vmatpush1.msra.mxu0 0.0
    %78 = vmatprep.subr.mxu0 0.0
    %79 = vmatpush1.msra.mxu0 0.0
    %80 = vmatprep.subr.mxu0 0.0
    %81 = vmatpush1.msra.mxu0 0.0
    %82 = vmatprep.subr.mxu0 0.0
    %83 = vmatpush1.msra.mxu0 %v52
    %84 = vmatprep.subr.mxu0 0.0
    %85 = vmatpush1.msra.mxu0 %v37
    %86 = vmatprep.subr.mxu0 0.0
    %87 = vmatpush2.msra.mxu0 0.0
    %88 = vmatprep.subr.mxu0 0.0
    %89 = vmatpush2.msra.mxu0 0.0
    %90 = vmatprep.subr.mxu0 0.0
    %91 = vmatpush2.msra.mxu0 0.0
    %92 = vmatprep.subr.mxu0 0.0
    %93 = vmatpush2.msra.mxu0 0.0
    %94 = vmatprep.subr.mxu0 0.0
    %95 = vmatpush2.msra.mxu0 0.0
    %96 = vmatprep.subr.mxu0 0.0
    %97 = vmatpush2.msra.mxu0 0.0
    %98 = vmatprep.subr.mxu0 0.0
    %99 = vmatpush2.msra.mxu0 0.0
    %100 = vmatprep.subr.mxu0 0.0
    %101 = vmatpush2.msra.mxu0 0.0
    %102 = vmatprep.subr.mxu0 0.0
    %103 = vmatpush2.msra.mxu0 0.0
    %104 = vmatprep.subr.mxu0 0.0
    %105 = vmatpush2.msra.mxu0 0.0
    %106 = vmatprep.subr.mxu0 0.0
    %107 = vmatpush2.msra.mxu0 0.0
    %108 = vmatprep.subr.mxu0 0.0
    %109 = vmatpush2.msra.mxu0 0.0
    %110 = vmatprep.subr.mxu0 0.0
    %111 = vmatpush2.msra.mxu0 0.0
    %112 = vmatprep.subr.mxu0 0.0
    %113 = vmatpush2.msra.mxu0 0.0
    %114 = vmatprep.subr.mxu0 0.0
    %115 = vmatpush2.msra.mxu0 0.0
    %116 = vmatprep.subr.mxu0 0.0
    %117 = vmatpush2.msra.mxu0 0.0
    %118 = vmatprep.mubr.f32.mxu0 0.0
    %119 = vmatmul.mubr.f32.gmra.mxu0 %v48
    %v120 = vpop.f32.mrf.mxu0
    %v121 = vadd.f32 %v44, %v120
    %v122 = vpop.f32.mrf.mxu0
    %123 = vdwg.mxu0
    %v124 = vld [vmem:[%s1] sm:$0xf]
    %v125 = vld [vmem:[%s4] sm:$0xff]
    %v126 = vld [vmem:[%s4 + $0x8] sm:$0xff]
    %v127 = vld [vmem:[%s4 + $0x10] sm:$0xff]
    %v128 = vld [vmem:[%s4 + $0x18] sm:$0xff]
    %v129 = vld [vmem:[%s5] sm:$0x1]
    %v131 = vlaneseq
    %v132 = vshrl.u32 %v131, 7
    %v133 = vsub.s32 0, %v132
    %v134 = vrot.slane %v129, %v133
    %vm136 = vcmask 261120
    %v138 = vsel %vm136, %v124, 0
    %140 = vmatprep.subr.mxu0 0.0
    %141 = vmatpush1.msra.mxu0 0.0
    %142 = vmatprep.subr.mxu0 0.0
    %143 = vmatpush1.msra.mxu0 0.0
    %144 = vmatprep.subr.mxu0 0.0
    %145 = vmatpush1.msra.mxu0 0.0
    %146 = vmatprep.subr.mxu0 0.0
    %147 = vmatpush1.msra.mxu0 0.0
    %148 = vmatprep.subr.mxu0 0.0
    %149 = vmatpush1.msra.mxu0 0.0
    %150 = vmatprep.subr.mxu0 0.0
    %151 = vmatpush1.msra.mxu0 0.0
    %152 = vmatprep.subr.mxu0 0.0
    %153 = vmatpush1.msra.mxu0 0.0
    %154 = vmatprep.subr.mxu0 0.0
    %155 = vmatpush1.msra.mxu0 0.0
    %156 = vmatprep.subr.mxu0 0.0
    %157 = vmatpush1.msra.mxu0 0.0
    %158 = vmatprep.subr.mxu0 0.0
    %159 = vmatpush1.msra.mxu0 0.0
    %160 = vmatprep.subr.mxu0 0.0
    %161 = vmatpush1.msra.mxu0 0.0
    %162 = vmatprep.subr.mxu0 0.0
    %163 = vmatpush1.msra.mxu0 0.0
    %164 = vmatprep.subr.mxu0 0.0
    %165 = vmatpush1.msra.mxu0 %v128
    %166 = vmatprep.subr.mxu0 0.0
    %167 = vmatpush1.msra.mxu0 %v127
    %168 = vmatprep.subr.mxu0 0.0
    %169 = vmatpush1.msra.mxu0 %v126
    %170 = vmatprep.subr.mxu0 0.0
    %171 = vmatpush1.msra.mxu0 %v125
    %172 = vmatprep.subr.mxu0 0.0
    %173 = vmatpush2.msra.mxu0 0.0
    %174 = vmatprep.subr.mxu0 0.0
    %175 = vmatpush2.msra.mxu0 0.0
    %176 = vmatprep.subr.mxu0 0.0
    %177 = vmatpush2.msra.mxu0 0.0
    %178 = vmatprep.subr.mxu0 0.0
    %179 = vmatpush2.msra.mxu0 0.0
    %180 = vmatprep.subr.mxu0 0.0
    %181 = vmatpush2.msra.mxu0 0.0
    %182 = vmatprep.subr.mxu0 0.0
    %183 = vmatpush2.msra.mxu0 0.0
    %184 = vmatprep.subr.mxu0 0.0
    %185 = vmatpush2.msra.mxu0 0.0
    %186 = vmatprep.subr.mxu0 0.0
    %187 = vmatpush2.msra.mxu0 0.0
    %188 = vmatprep.subr.mxu0 0.0
    %189 = vmatpush2.msra.mxu0 0.0
    %190 = vmatprep.subr.mxu0 0.0
    %191 = vmatpush2.msra.mxu0 0.0
    %192 = vmatprep.subr.mxu0 0.0
    %193 = vmatpush2.msra.mxu0 0.0
    %194 = vmatprep.subr.mxu0 0.0
    %195 = vmatpush2.msra.mxu0 0.0
    %196 = vmatprep.subr.mxu0 0.0
    %197 = vmatpush2.msra.mxu0 0.0
    %198 = vmatprep.subr.mxu0 0.0
    %199 = vmatpush2.msra.mxu0 0.0
    %200 = vmatprep.subr.mxu0 0.0
    %201 = vmatpush2.msra.mxu0 0.0
    %202 = vmatprep.subr.mxu0 0.0
    %203 = vmatpush2.msra.mxu0 0.0
    %204 = vmatprep.mubr.f32.mxu0 0.0
    %205 = vmatmul.mubr.f32.gmra.mxu0 %v138
    %v206 = vpop.f32.mrf.mxu0
    %v207 = vadd.f32 %v134, %v206
    %v208 = vpop.f32.mrf.mxu0
    %209 = vdwg.mxu0
    %v210 = vld [vmem:[%s6] sm:$0xff]
    %v211 = vld [vmem:[%s6 + $0x8] sm:$0xff]
    %v212 = vld [vmem:[%s7] sm:$0x1]
    %v214 = vlaneseq
    %v215 = vshrl.u32 %v214, 7
    %v216 = vsub.s32 0, %v215
    %v217 = vrot.slane %v212, %v216
    %vm219 = vcmask 130048
    %v221 = vsel %vm219, %v121, 0
    %223 = vmatprep.subr.mxu0 0.0
    %224 = vmatpush1.msra.mxu0 0.0
    %225 = vmatprep.subr.mxu0 0.0
    %226 = vmatpush1.msra.mxu0 0.0
    %227 = vmatprep.subr.mxu0 0.0
    %228 = vmatpush1.msra.mxu0 0.0
    %229 = vmatprep.subr.mxu0 0.0
    %230 = vmatpush1.msra.mxu0 0.0
    %231 = vmatprep.subr.mxu0 0.0
    %232 = vmatpush1.msra.mxu0 0.0
    %233 = vmatprep.subr.mxu0 0.0
    %234 = vmatpush1.msra.mxu0 0.0
    %235 = vmatprep.subr.mxu0 0.0
    %236 = vmatpush1.msra.mxu0 0.0
    %237 = vmatprep.subr.mxu0 0.0
    %238 = vmatpush1.msra.mxu0 0.0
    %239 = vmatprep.subr.mxu0 0.0
    %240 = vmatpush1.msra.mxu0 0.0
    %241 = vmatprep.subr.mxu0 0.0
    %242 = vmatpush1.msra.mxu0 0.0
    %243 = vmatprep.subr.mxu0 0.0
    %244 = vmatpush1.msra.mxu0 0.0
    %245 = vmatprep.subr.mxu0 0.0
    %246 = vmatpush1.msra.mxu0 0.0
    %247 = vmatprep.subr.mxu0 0.0
    %248 = vmatpush1.msra.mxu0 0.0
    %249 = vmatprep.subr.mxu0 0.0
    %250 = vmatpush1.msra.mxu0 0.0
    %251 = vmatprep.subr.mxu0 0.0
    %252 = vmatpush1.msra.mxu0 %v211
    %253 = vmatprep.subr.mxu0 0.0
    %254 = vmatpush1.msra.mxu0 %v210
    %255 = vmatprep.subr.mxu0 0.0
    %256 = vmatpush2.msra.mxu0 0.0
    %257 = vmatprep.subr.mxu0 0.0
    %258 = vmatpush2.msra.mxu0 0.0
    %259 = vmatprep.subr.mxu0 0.0
    %260 = vmatpush2.msra.mxu0 0.0
    %261 = vmatprep.subr.mxu0 0.0
    %262 = vmatpush2.msra.mxu0 0.0
    %263 = vmatprep.subr.mxu0 0.0
    %264 = vmatpush2.msra.mxu0 0.0
    %265 = vmatprep.subr.mxu0 0.0
    %266 = vmatpush2.msra.mxu0 0.0
    %267 = vmatprep.subr.mxu0 0.0
    %268 = vmatpush2.msra.mxu0 0.0
    %269 = vmatprep.subr.mxu0 0.0
    %270 = vmatpush2.msra.mxu0 0.0
    %271 = vmatprep.subr.mxu0 0.0
    %272 = vmatpush2.msra.mxu0 0.0
    %273 = vmatprep.subr.mxu0 0.0
    %274 = vmatpush2.msra.mxu0 0.0
    %275 = vmatprep.subr.mxu0 0.0
    %276 = vmatpush2.msra.mxu0 0.0
    %277 = vmatprep.subr.mxu0 0.0
    %278 = vmatpush2.msra.mxu0 0.0
    %279 = vmatprep.subr.mxu0 0.0
    %280 = vmatpush2.msra.mxu0 0.0
    %281 = vmatprep.subr.mxu0 0.0
    %282 = vmatpush2.msra.mxu0 0.0
    %283 = vmatprep.subr.mxu0 0.0
    %284 = vmatpush2.msra.mxu0 0.0
    %285 = vmatprep.subr.mxu0 0.0
    %286 = vmatpush2.msra.mxu0 0.0
    %287 = vmatprep.mubr.f32.mxu0 0.0
    %288 = vmatmul.mubr.f32.gmra.mxu0 %v221
    %v289 = vpop.f32.mrf.mxu0
    %v290 = vadd.f32 %v217, %v289
    %v291 = vpop.f32.mrf.mxu0
    %292 = vdwg.mxu0
    %v293 = vmul.f32 %v290, %v290
    %vm294 = vcmask 254976
    %v295 = vsel %vm294, %v293, 0.0
    %296 = vadd.xlane.f32.xlu0 %v295
    %v297 = vpop.xlane.xlu0 %296
    %v298 = vadd.f32 %v297, 1e-12
    %v299 = vrsqrt.pop %v298
    %v300 = vmul.f32 %v290, %v299
    %v301 = vld [vmem:[%s8] sm:$0xff]
    %v302 = vld [vmem:[%s8 + $0x8] sm:$0xff]
    %v303 = vld [vmem:[%s9] sm:$0x1]
    %v305 = vlaneseq
    %v306 = vshrl.u32 %v305, 7
    %v307 = vsub.s32 0, %v306
    %v308 = vrot.slane %v303, %v307
    %v311 = vsel %vm219, %v207, 0
    %313 = vmatprep.subr.mxu0 0.0
    %314 = vmatpush1.msra.mxu0 0.0
    %315 = vmatprep.subr.mxu0 0.0
    %316 = vmatpush1.msra.mxu0 0.0
    %317 = vmatprep.subr.mxu0 0.0
    %318 = vmatpush1.msra.mxu0 0.0
    %319 = vmatprep.subr.mxu0 0.0
    %320 = vmatpush1.msra.mxu0 0.0
    %321 = vmatprep.subr.mxu0 0.0
    %322 = vmatpush1.msra.mxu0 0.0
    %323 = vmatprep.subr.mxu0 0.0
    %324 = vmatpush1.msra.mxu0 0.0
    %325 = vmatprep.subr.mxu0 0.0
    %326 = vmatpush1.msra.mxu0 0.0
    %327 = vmatprep.subr.mxu0 0.0
    %328 = vmatpush1.msra.mxu0 0.0
    %329 = vmatprep.subr.mxu0 0.0
    %330 = vmatpush1.msra.mxu0 0.0
    %331 = vmatprep.subr.mxu0 0.0
    %332 = vmatpush1.msra.mxu0 0.0
    %333 = vmatprep.subr.mxu0 0.0
    %334 = vmatpush1.msra.mxu0 0.0
    %335 = vmatprep.subr.mxu0 0.0
    %336 = vmatpush1.msra.mxu0 0.0
    %337 = vmatprep.subr.mxu0 0.0
    %338 = vmatpush1.msra.mxu0 0.0
    %339 = vmatprep.subr.mxu0 0.0
    %340 = vmatpush1.msra.mxu0 0.0
    %341 = vmatprep.subr.mxu0 0.0
    %342 = vmatpush1.msra.mxu0 %v302
    %343 = vmatprep.subr.mxu0 0.0
    %344 = vmatpush1.msra.mxu0 %v301
    %345 = vmatprep.subr.mxu0 0.0
    %346 = vmatpush2.msra.mxu0 0.0
    %347 = vmatprep.subr.mxu0 0.0
    %348 = vmatpush2.msra.mxu0 0.0
    %349 = vmatprep.subr.mxu0 0.0
    %350 = vmatpush2.msra.mxu0 0.0
    %351 = vmatprep.subr.mxu0 0.0
    %352 = vmatpush2.msra.mxu0 0.0
    %353 = vmatprep.subr.mxu0 0.0
    %354 = vmatpush2.msra.mxu0 0.0
    %355 = vmatprep.subr.mxu0 0.0
    %356 = vmatpush2.msra.mxu0 0.0
    %357 = vmatprep.subr.mxu0 0.0
    %358 = vmatpush2.msra.mxu0 0.0
    %359 = vmatprep.subr.mxu0 0.0
    %360 = vmatpush2.msra.mxu0 0.0
    %361 = vmatprep.subr.mxu0 0.0
    %362 = vmatpush2.msra.mxu0 0.0
    %363 = vmatprep.subr.mxu0 0.0
    %364 = vmatpush2.msra.mxu0 0.0
    %365 = vmatprep.subr.mxu0 0.0
    %366 = vmatpush2.msra.mxu0 0.0
    %367 = vmatprep.subr.mxu0 0.0
    %368 = vmatpush2.msra.mxu0 0.0
    %369 = vmatprep.subr.mxu0 0.0
    %370 = vmatpush2.msra.mxu0 0.0
    %371 = vmatprep.subr.mxu0 0.0
    %372 = vmatpush2.msra.mxu0 0.0
    %373 = vmatprep.subr.mxu0 0.0
    %374 = vmatpush2.msra.mxu0 0.0
    %375 = vmatprep.subr.mxu0 0.0
    %376 = vmatpush2.msra.mxu0 0.0
    %377 = vmatprep.mubr.f32.mxu0 0.0
    %378 = vmatmul.mubr.f32.gmra.mxu0 %v311
    %v379 = vpop.f32.mrf.mxu0
    %v380 = vadd.f32 %v308, %v379
    %v381 = vpop.f32.mrf.mxu0
    %382 = vdwg.mxu0
    %v383 = vmul.f32 %v380, %v380
    %vm384 = vcmask 257024
    %v385 = vsel %vm384, %v383, 0.0
    %386 = vadd.xlane.f32.xlu0 %v385
    %v387 = vpop.xlane.xlu0 %386
    %v388 = vadd.f32 %v387, 1e-12
    %v389 = vrsqrt.pop %v388
    %v390 = vmul.f32 %v380, %v389
    %v391 = vmul.f32 %v300, %v390
    %v392 = vsel %vm294, %v391, 0.0
    %393 = vadd.xlane.f32.xlu0 %v392
    %v394 = vpop.xlane.xlu0 %393
    %v396 = vrot.slane %v390, 2
    %v398 = vmul.f32 %v300, %v396
    %v399 = vsel %vm294, %v398, 0.0
    %400 = vadd.xlane.f32.xlu0 %v399
    %v401 = vpop.xlane.xlu0 %400
    %v402 = vmul.f32 %v394, 1.442695
    %v403 = vpow.pop %v402
    %v404 = vadd.f32 %v403, 9.084302e-05
    %v405 = vlog2.pop %v404
    %v406 = vmul.f32 %v405, 0.6931472
    %v407 = vsub.f32 %v394, %v406
    %v408 = vmul.f32 %v401, 1.442695
    %v409 = vpow.pop %v408
    %v410 = vadd.f32 %v409, 9.084302e-05
    %v411 = vlog2.pop %v410
    %v412 = vmul.f32 %v411, 0.6931472
    %v413 = vsub.f32 -9.306377, %v412
    %vm414 = vcmask 1024
    %v415 = vsel %vm414, %v407, 0.0
    %416 = vadd.xlane.f32.xlu0 %v415
    %v417 = vpop.xlane.xlu0 %416
    %v418 = vrot.slane %v417, 4
    %v419 = vadd.f32 %v417, %v418
    %v420 = vrot.slane %v419, 2
    %v421 = vadd.f32 %v419, %v420
    %v422 = vrot.slane %v421, 1
    %v423 = vadd.f32 %v421, %v422
    %s424 = vtos %v423
    %v425 = vrcp.pop 2.0
    %s426 = vtos %v425
    %s427 = smul.f32 %s424, %s426
    %s428 = ssub.f32 0.0, %s427
    %v429 = vsel %vm414, %v413, 0.0
    %430 = vadd.xlane.f32.xlu0 %v429
    %v431 = vpop.xlane.xlu0 %430
    %v432 = vrot.slane %v431, 4
    %v433 = vadd.f32 %v431, %v432
    %v434 = vrot.slane %v433, 2
    %v435 = vadd.f32 %v433, %v434
    %v436 = vrot.slane %v435, 1
    %v437 = vadd.f32 %v435, %v436
    %s438 = vtos %v437
    %v439 = vrcp.pop 2.0
    %s440 = vtos %v439
    %s441 = smul.f32 %s438, %s440
    %s442 = ssub.f32 %s428, %s441
    %s443 = scalar_lea.smem [#allocation2], 0
    %444 = sst [smem:[%s443]] %s442
    // Predicated region
    $region42: #{grt_forward.1} parent=1 // pred_check
      _
    $region43: #{grt_forward.1} parent=1 // pred_check_branch
      %446 = sbr.rel (0) target = $region45
    $region44: #{grt_forward.1} parent=1 // pred_region
      %s448 = ssub.s32 16, 16
      %449 = vsyncadd [#allocation3], %s448
      %452 = dma.smem_to_hbm [#allocation2], 16, %s10, [#allocation3]
    $region45: #{grt_forward.1} parent=1 // pred_fallthru
      _
    // Predicated region
    $region46: #{grt_forward.1} parent=1 // pred_check
      _
    $region47: #{grt_forward.1} parent=1 // pred_check_branch
      %454 = sbr.rel (0) target = $region49
    $region48: #{grt_forward.1} parent=1 // pred_region
      %455 = dma.done [#allocation3], 16
    $region49: #{grt_forward.1} parent=1 // pred_fallthru
      _
    %456 = sfence
    %457 = vsyncpa [#allocation3], 1

</llo_original>
